<compile_context>
chip_gen: v6e
topology: v6e:2x2x1
jax: 0.10.0
libtpu: 0.0.40
codegen_flags: <defaults>
</compile_context>

<pallas_src>
import jax
import jax.numpy as jnp
from jax import lax
from jax.experimental import pallas as pl
from jax.experimental.pallas import tpu as pltpu


def _round_up(x: int, m: int) -> int:
    return ((x + m - 1) // m) * m


def _vmem_capacity_bytes() -> int:
    """Physical VMEM per TensorCore; conservative fallback if unqueryable."""
    try:
        info = pltpu.get_tpu_info()
        return int(getattr(info, "vmem_capacity_bytes", 64 << 20))
    except Exception:  # pragma: no cover - defensive
        return 64 << 20


def _pick_flat_block_rows(rows: int, bytes_per_row: int, target_bytes: int) -> int:
    """Rows per block for the 2-D flattened path.

    Second-to-last block dim must be a multiple of 8 or the full extent; aim
    for grid >= 4 so megacore sharding (v7x) and DMA/compute overlap kick in.
    """
    if rows < 8:
        return rows  # full extent is the only legal non-multiple-of-8 choice
    cap = max(8, (max(1, target_bytes // max(1, bytes_per_row)) // 8) * 8)
    want = max(8, _round_up(pl.cdiv(rows, 4), 8))
    return min(cap, want)


def _pick_3d_block_rows(rows: int, bytes_per_row: int, target_bytes: int) -> int:
    """Rows per block for the 3-D fallback path (leading dim is unconstrained)."""
    cap = max(1, target_bytes // max(1, bytes_per_row))
    if rows <= 2:
        return rows
    want = max(1, pl.cdiv(rows, 4))
    return max(1, min(cap, want))


def _make_flat_mask_kernel(L: int, hw: int):
    """Lane-dense path on the (rows, H*W) flattened view.

    x_ref is only the first L (lane-aligned) columns; mask_ref is a resident
    (1, L) 0/1 mask. Both stores are lane-aligned.
    """
    def kernel(x_ref, mask_ref, o_ref):
        x = x_ref[...]                                        # (b, L)
        m = jnp.broadcast_to(mask_ref[...], x.shape)          # (b, L), x.dtype
        o_ref[:, :L] = jnp.where(m > 0, x, jnp.zeros_like(x))
        if hw > L:
            o_ref[:, L:] = jnp.zeros((o_ref.shape[0], hw - L), o_ref.dtype)
    return kernel


def _make_crop_pad_kernel(crop_h: int, crop_w: int, hb: int, W: int,
                          H_out: int, W_out: int):
    """General path: input block is only the top `hb` rows of the image.

    Produces the padded output block with non-overlapping, sublane-aligned
    stores (no zero-fill + overwrite).
    """
    def kernel(x_ref, o_ref):
        x = x_ref[...]                                        # (b, hb, W)
        row = lax.broadcasted_iota(jnp.int32, x.shape, 1)
        col = lax.broadcasted_iota(jnp.int32, x.shape, 2)
        keep = (row < crop_h) & (col < crop_w)
        xm = jnp.where(keep, x, jnp.zeros_like(x))
        if W_out < W:
            xm = xm[:, :, :W_out]
        elif W_out > W:
            zpad = jnp.zeros((xm.shape[0], xm.shape[1], W_out - W), xm.dtype)
            xm = jnp.concatenate([xm, zpad], axis=2)
        if hb < H_out:
            o_ref[:, :hb, :] = xm
            o_ref[:, hb:, :] = jnp.zeros((o_ref.shape[0], H_out - hb, W_out),
                                         o_ref.dtype)
        else:
            o_ref[...] = xm
    return kernel


def upper_left_crop_with_pad_back(image: jax.Array, crop_size: float) -> jax.Array:
    N, C, H, W = image.shape
    crop_h = int(crop_size * H)
    crop_w = int(crop_size * W)
    pad = H - crop_h
    H_out = crop_h + pad              # == H
    W_out = crop_w + pad

    if crop_h <= 0 or crop_w <= 0:
        # Degenerate crop: output is all padding (all zeros).
        return jnp.zeros((N, C, H_out, W_out), dtype=image.dtype)

    rows = N * C
    itemsize = jnp.dtype(image.dtype).itemsize

    # Generation-aware budgets: ~12 MiB combined (in+out) per step on
    # 128-MiB-VMEM chips (v5e/v6e), ~8 MiB on v7x (64 MiB); raise the scoped
    # VMEM limit explicitly so double-buffering fits on every generation.
    vmem = _vmem_capacity_bytes()
    target_tile_bytes = max(2 << 20, min(12 << 20, vmem // 8))
    vmem_limit = int(min(32 << 20, max(16 << 20, vmem // 2)))
    compiler_params = pltpu.CompilerParams(
        dimension_semantics=("parallel",),
        vmem_limit_bytes=vmem_limit,
    )

    use_flat = (H_out == H and W_out == W)
    if use_flat:
        hw = H * W
        L = min(hw, _round_up(crop_h * W, 128))
        flat_bytes_per_row = (L + hw) * itemsize
        # Minimum legal block (8 rows) must fit double-buffered; otherwise use
        # the 3-D path, which can shrink to a single image per block.
        if 2 * min(rows, 8) * flat_bytes_per_row > vmem_limit:
            use_flat = False

    if use_flat:
        # Crop + pad-back preserves the spatial size -> pure elementwise mask on
        # the flattened (rows, H*W) view. Only the first L lanes are ever read.
        x = image.reshape(rows, hw)
        b = _pick_flat_block_rows(rows, flat_bytes_per_row, target_tile_bytes)

        lane = jnp.arange(L, dtype=jnp.int32)
        keep = ((lane // W) < crop_h) & ((lane % W) < crop_w)
        mask = keep.astype(image.dtype).reshape(1, L)   # tiny, built once

        out = pl.pallas_call(
            _make_flat_mask_kernel(L, hw),
            out_shape=jax.ShapeDtypeStruct((rows, hw), image.dtype),
            grid_spec=pltpu.PrefetchScalarGridSpec(
                num_scalar_prefetch=0,
                grid=(pl.cdiv(rows, b),),
                in_specs=[
                    pl.BlockSpec((b, L), lambda i: (i, 0)),     # only used lanes
                    pl.BlockSpec((1, L), lambda i: (0, 0)),     # resident mask
                ],
                out_specs=pl.BlockSpec((b, hw), lambda i: (i, 0)),
            ),
            compiler_params=compiler_params,
        )(x, mask)
        return out.reshape(N, C, H_out, W_out)

    # General (non-square) fallback: no wrapper-side slice materialization; the
    # BlockSpec reads only the top round_up(crop_h, 8) rows of the image.
    ch8 = min(H, _round_up(crop_h, 8))
    x = image.reshape(rows, H, W)
    bytes_per_row = (ch8 * W + H_out * W_out) * itemsize
    b = _pick_3d_block_rows(rows, bytes_per_row, target_tile_bytes)

    out = pl.pallas_call(
        _make_crop_pad_kernel(crop_h, crop_w, ch8, W, H_out, W_out),
        out_shape=jax.ShapeDtypeStruct((rows, H_out, W_out), image.dtype),
        grid_spec=pltpu.PrefetchScalarGridSpec(
            num_scalar_prefetch=0,
            grid=(pl.cdiv(rows, b),),
            in_specs=[pl.BlockSpec((b, ch8, W), lambda i: (i, 0, 0))],
            out_specs=pl.BlockSpec((b, H_out, W_out), lambda i: (i, 0, 0)),
        ),
        compiler_params=compiler_params,
    )(x)
    return out.reshape(N, C, H_out, W_out)


def _reference(image: jax.Array, crop_size: float) -> jax.Array:
    # Pure-JAX reference of the same semantics, for verification only.
    N, C, H, W = image.shape
    crop_h = int(crop_size * H)
    crop_w = int(crop_size * W)
    pad = H - crop_h
    cropped = image[:, :, :crop_h, :crop_w]
    return jnp.pad(cropped, ((0, 0), (0, 0), (0, pad), (0, pad)),
                   mode="constant", constant_values=0)


if __name__ == "__main__":
    key = jax.random.PRNGKey(0)

    # Primary case (square, lane-dense flattened path).
    x = jax.random.normal(key, (2, 4, 16, 16), dtype=jnp.float32)
    crop_size = 0.5
    y = jax.block_until_ready(upper_left_crop_with_pad_back(x, crop_size))
    y_ref = _reference(x, crop_size)
    assert y.shape == y_ref.shape, (y.shape, y_ref.shape)
    assert jnp.allclose(y, y_ref), "mismatch vs reference (square path)"

    # Non-square case (general fallback path).
    x2 = jax.random.normal(jax.random.PRNGKey(1), (2, 3, 16, 24), dtype=jnp.float32)
    y2 = jax.block_until_ready(upper_left_crop_with_pad_back(x2, crop_size))
    y2_ref = _reference(x2, crop_size)
    assert y2.shape == y2_ref.shape, (y2.shape, y2_ref.shape)
    assert jnp.allclose(y2, y2_ref), "mismatch vs reference (non-square path)"

    print("KERNEL_OK")
</pallas_src>

<mosaic_0001>
module attributes {stable_mosaic.version = 11 : i64} {
  func.func @kernel(%arg0: i32, %arg1: memref<8x128xf32, #tpu.memory_space<vmem>>, %arg2: memref<1x128xf32, #tpu.memory_space<vmem>>, %arg3: memref<8x256xf32, #tpu.memory_space<vmem>>) attributes {dimension_semantics = [#tpu.dimension_semantics<parallel>], iteration_bounds = array<i64: 1>, scalar_prefetch = 0 : i64, scratch_operands = 0 : i64, tpu.core_type = #tpu.core_type<tc>, window_params = [{transform_indices = @transform_0, window_bounds = array<i64: 8, 128>}, {pipeline_mode = #tpu.pipeline_mode<synchronous>, transform_indices = @transform_1, window_bounds = array<i64: 1, 128>}, {transform_indices = @transform_2, window_bounds = array<i64: 8, 256>}]} {
    %c0 = arith.constant 0 : index
    %c0_0 = arith.constant 0 : index
    %0 = vector.load %arg1[%c0, %c0_0] : memref<8x128xf32, #tpu.memory_space<vmem>>, vector<8x128xf32>
    %c0_1 = arith.constant 0 : index
    %c0_2 = arith.constant 0 : index
    %1 = vector.load %arg2[%c0_1, %c0_2] : memref<1x128xf32, #tpu.memory_space<vmem>>, vector<1x128xf32>
    %2 = vector.shape_cast %1 : vector<1x128xf32> to vector<1x128xf32>
    %3 = vector.broadcast %2 : vector<1x128xf32> to vector<8x128xf32>
    %cst = arith.constant 0.000000e+00 : f32
    %4 = vector.broadcast %cst : f32 to vector<8x128xf32>
    %5 = arith.cmpf ogt, %3, %4 : vector<8x128xf32>
    %cst_3 = arith.constant 0.000000e+00 : f32
    %6 = vector.broadcast %cst_3 : f32 to vector<8x128xf32>
    %7 = arith.select %5, %0, %6 : vector<8x128xi1>, vector<8x128xf32>
    %c0_4 = arith.constant 0 : index
    %c0_5 = arith.constant 0 : index
    %8 = vector.load %arg3[%c0_4, %c0_5] : memref<8x256xf32, #tpu.memory_space<vmem>>, vector<8x128xf32>
    tpu.vector_store %arg3[%c0_4, %c0_5], %7 {strides = array<i32>} : memref<8x256xf32, #tpu.memory_space<vmem>>, vector<8x128xf32>,
    %cst_6 = arith.constant 0.000000e+00 : f32
    %9 = vector.broadcast %cst_6 : f32 to vector<8x128xf32>
    %c0_7 = arith.constant 0 : index
    %c128 = arith.constant 128 : index
    %10 = vector.load %arg3[%c0_7, %c128] : memref<8x256xf32, #tpu.memory_space<vmem>>, vector<8x128xf32>
    tpu.vector_store %arg3[%c0_7, %c128], %9 {strides = array<i32>} : memref<8x256xf32, #tpu.memory_space<vmem>>, vector<8x128xf32>,
    return
  }
  func.func @transform_0(%arg0: i32) -> (i32, i32) {
    %c0_i32 = arith.constant 0 : i32
    %c0_i32_0 = arith.constant 0 : i32
    return %arg0, %c0_i32 : i32, i32
  }
  func.func @transform_1(%arg0: i32) -> (i32, i32) {
    %c0_i32 = arith.constant 0 : i32
    %c0_i32_0 = arith.constant 0 : i32
    %c0_i32_1 = arith.constant 0 : i32
    return %c0_i32, %c0_i32_0 : i32, i32
  }
  func.func @transform_2(%arg0: i32) -> (i32, i32) {
    %c0_i32 = arith.constant 0 : i32
    %c0_i32_0 = arith.constant 0 : i32
    return %arg0, %c0_i32 : i32, i32
  }
}

</mosaic_0001>

<llo_original>
// kernel: tpu_custom_call.1
$region0: #{tpu_custom_call.1}
  #allocation0 [shape = 'u32[]', space=smem, size = 0x4, offset = 0x4, fixed_abs, tag = 'smem constant byte address 0x4 - core index']
  #allocation1 [shape = 'u32[144,128]{1,0:T(1,128)}', space=vmem, size = 0x12000, scoped, tag = 'internal scratch']
  %s0 = inlined_call_operand.hbm [shape: f32[8,256], index: 0, kind: input, shape index: {}]
  %s1 = inlined_call_operand.vmem [shape: f32[1,128], index: 1, kind: input, shape index: {}]
  %s2 = inlined_call_operand.hbm [shape: f32[8,256], index: 2, kind: output, shape index: {}]
  %s3 = sld [smem:[#allocation0]]
  $region22: #{tpu_custom_call.1} parent=0
    _
  %s5 = ssub.s32 1, %s3
  %s6 = scalar_select 0, %s5, %s3
  $region1: #{tpu_custom_call.1} parent=0
    #allocation2 [shape = 'u8[4096]{0}', space=vmem, size = 0x1000, scoped, tag = 'input window, operand 0, single buffered']
    #allocation3 [shape = 's32[1]{0}', space=sflag, size = 0x4, scoped, tag = 'scoped memory for tpu_custom_call.1']
    #allocation4 [shape = 's32[1]{0}', space=sflag, size = 0x4, scoped, tag = 'scoped memory for tpu_custom_call.1']
    #allocation5 [shape = 'u8[8192]{0}', space=vmem, size = 0x2000, scoped, tag = 'output window, operand 0, single buffered']
    %7 = vsyncpa [#allocation3], 0
    %8 = vsyncpa [#allocation4], 0
    // Predicated region
    $region2: #{tpu_custom_call.1} parent=1 // pred_check
      _
    $region3: #{tpu_custom_call.1} parent=1 // pred_check_branch
      %10 = sbr.rel (0) target = $region5
    $region4: #{tpu_custom_call.1} parent=1 // pred_region
      %s12 = ssub.s32 128, 128
      %13 = vsyncadd [#allocation3], %s12
      %s15 = sshll.u32 [#allocation2], 4
      %s16 = int_to_ptr.vmem [resolvable:$true] %s15
      %18 = dma.hbm_to_vmem [thread:$0]  %s0, 128, %s16, [#allocation3]
    $region5: #{tpu_custom_call.1} parent=1 // pred_fallthru
      _
    // Predicated region
    $region6: #{tpu_custom_call.1} parent=1 // pred_check
      _
    $region7: #{tpu_custom_call.1} parent=1 // pred_check_branch
      %20 = sbr.rel (0) target = $region9
    $region8: #{tpu_custom_call.1} parent=1 // pred_region
      _
    $region9: #{tpu_custom_call.1} parent=1 // pred_fallthru
      _
    // Predicated region
    $region10: #{tpu_custom_call.1} parent=1 // pred_check
      _
    $region11: #{tpu_custom_call.1} parent=1 // pred_check_branch
      %22 = sbr.rel (0) target = $region13
    $region12: #{tpu_custom_call.1} parent=1 // pred_region
      %23 = dma.done [#allocation3], 128
    $region13: #{tpu_custom_call.1} parent=1 // pred_fallthru
      _
    %v24 = vld [vmem:[#allocation2] sm:$0xff]
    %v25 = vld [vmem:[%s1] sm:$0x1]
    %v27 = vlaneseq
    %v28 = vshrl.u32 %v27, 7
    %v29 = vsub.s32 0, %v28
    %v30 = vrot.slane %v25, %v29
    %vm32 = vcmp.gt.f32.partialorder %v30, 0.0
    %v33 = vsel %vm32, %v24, 0.0
    %34 = vst [vmem:[#allocation5] sm:$0xff] %v33
    %35 = vst [vmem:[#allocation5 + $0x8] sm:$0xff] 0.0
    // Predicated region
    $region14: #{tpu_custom_call.1} parent=1 // pred_check
      _
    $region15: #{tpu_custom_call.1} parent=1 // pred_check_branch
      %37 = sbr.rel (0) target = $region17
    $region16: #{tpu_custom_call.1} parent=1 // pred_region
      %s39 = ssub.s32 256, 256
      %40 = vsyncadd [#allocation4], %s39
      %s42 = sshll.u32 [#allocation5], 4
      %s43 = int_to_ptr.vmem [resolvable:$true] %s42
      %45 = dma.vmem_to_hbm [thread:$0]  %s43, 256, %s2, [#allocation4]
    $region17: #{tpu_custom_call.1} parent=1 // pred_fallthru
      _
    // Predicated region
    $region18: #{tpu_custom_call.1} parent=1 // pred_check
      _
    $region19: #{tpu_custom_call.1} parent=1 // pred_check_branch
      %47 = sbr.rel (0) target = $region21
    $region20: #{tpu_custom_call.1} parent=1 // pred_region
      %48 = dma.done [#allocation4], 256
    $region21: #{tpu_custom_call.1} parent=1 // pred_fallthru
      _
    %49 = vsyncpa [#allocation3], 1
    %50 = vsyncpa [#allocation4], 1

</llo_original>
